<compile_context>
chip_gen: v7x
topology: tpu7x:2x2x1
jax: 0.10.0
libtpu: 0.0.40
codegen_flags: <defaults>
</compile_context>

<pallas_src>
import functools
import math

import jax
import jax.numpy as jnp
from jax.experimental import pallas as pl
from jax.experimental.pallas import tpu as pltpu


def _conv_bn_silu_kernel(*refs, k, TH, W, use_halo):
    """One (batch, row-tile) grid step.

    refs (in order):
      x_ref:     (1, TH, Win, C1)        main rows of the padded NHWC input
      halo_ref:  (1, k-1, Win, C1)       next k-1 rows (only when use_halo)
      w_ref:     (k*k*C1, C2p)           im2col conv weights (tap-major: dx, dy, ci)
      scale_ref: (1, C2p)                folded BN scale = gamma / sqrt(var + eps)
      shift_ref: (1, C2p)                folded BN shift = beta - mean * scale
      o_ref:     (1, TH, W, C2p)         lane-dense output tile
    """
    if use_halo:
        x_ref, halo_ref, w_ref, scale_ref, shift_ref, o_ref = refs
        x_full = jnp.concatenate([x_ref[0], halo_ref[0]], axis=0)   # (TH+k-1, Win, C1)
    else:
        x_ref, w_ref, scale_ref, shift_ref, o_ref = refs
        x_full = x_ref[0]                                           # (TH+k-1, Win, C1)

    C1 = x_full.shape[-1]
    C2p = o_ref.shape[-1]

    if k > 1:
        taps = []
        for dx in range(k):                       # only k window slices on the sublane axis
            x_win = x_full[:, dx:dx + W, :]       # (TH+k-1, W, C1)
            for dy in range(k):
                taps.append(x_win[dy:dy + TH])    # cheap leading-axis slice
        cols = jnp.concatenate(taps, axis=-1)     # (TH, W, k*k*C1)  im2col buffer
    else:
        cols = x_full                             # (TH, W, C1)  pointwise conv

    lhs = cols.reshape(TH * W, k * k * C1)        # W % 8 == 0 -> layout-compatible reshape
    # Single MXU matmul; operands stay in their input dtype, accumulation in f32.
    acc = jnp.dot(lhs, w_ref[...], preferred_element_type=jnp.float32)   # (TH*W, C2p)

    # Fused BatchNorm (folded scale/shift) + SiLU; exp and reciprocal run on the EUP slot.
    y = acc * scale_ref[...] + shift_ref[...]
    y = y * pl.reciprocal(1.0 + jnp.exp(-y), approx=True)
    o_ref[0] = y.reshape(TH, W, C2p).astype(o_ref.dtype)


def _round_up(v, m):
    return ((v + m - 1) // m) * m


def _choose_row_tile(H, W, Win, C1, C2p, k, itemsize):
    """Pick an output-row tile TH (multiple of 8 and of k-1). Returns (TH, tiled)."""
    unit = 8 if k == 1 else (8 * (k - 1)) // math.gcd(8, k - 1)   # lcm(8, k-1)
    if H % unit != 0:
        return H, False            # fall back: whole image per grid step

    def tile_bytes(t):             # rough double-buffered in+out footprint per step
        return 2 * ((t + k - 1) * Win * C1 + t * W * C2p) * max(itemsize, 4)

    th = unit
    while (H % (th * 2) == 0 and H // (th * 2) >= 2 and th * 2 <= 256
           and tile_bytes(th * 2) <= (4 << 20)):
        th *= 2
    return th, True


def conv_bn_silu(x_nchw, weight, gamma, beta, running_mean, running_var, *, eps=1e-5):
    """Fused Conv2d(bias=False, s=1, g=1, d=1, 'same' autopad) + BatchNorm2d(eval) + SiLU.
    x_nchw: (N, C1, H, W) (PyTorch layout), weight: (C2, C1, k, k).  Returns (N, C2, H, W)."""
    N, C1, H, W = x_nchw.shape
    C2, C1w, kh, kw = weight.shape
    assert C1w == C1 and kh == kw, "only square, non-grouped kernels supported"
    k = kh
    assert k % 2 == 1, "autopad 'same' output requires an odd kernel size"
    p = k // 2
    # TODO(synk): stride>1, groups>1, dilation>1 and training-mode (batch-statistics) BatchNorm
    #             are not implemented (module defaults: s=1, g=1, d=1, eval-mode BN).

    # NCHW -> NHWC so channels sit on the lane axis, then 'same'-pad the spatial dims.
    # TODO(synk): fold this zero-pad into the kernel (zeroed VMEM + offset DMA) to avoid one
    #             extra full HBM read/write pass over the activation.
    x = jnp.transpose(x_nchw, (0, 2, 3, 1))
    if p:
        x = jnp.pad(x, ((0, 0), (p, p), (p, p), (0, 0)))
    Hin, Win = H + 2 * p, W + 2 * p

    # Lane-dense output channels: pad C2 up to a multiple of 128 (sliced off after the call).
    C2p = _round_up(C2, 128)

    # im2col weights (original dtype -- no f32 upcast): (C2, C1, kh, kw) -> (k*k*C1, C2p) with
    # w[(dx*k + dy)*C1 + ci, co] = weight[co, ci, dy, dx]  (matches the kernel's tap order).
    w = jnp.transpose(weight, (3, 2, 1, 0)).reshape(k * k * C1, C2)
    if C2p != C2:
        w = jnp.pad(w, ((0, 0), (0, C2p - C2)))

    # Fold eval-mode BatchNorm into per-output-channel scale/shift (f32).
    inv = jax.lax.rsqrt(running_var.astype(jnp.float32) + eps)
    scale = gamma.astype(jnp.float32) * inv
    shift = beta.astype(jnp.float32) - running_mean.astype(jnp.float32) * scale
    if C2p != C2:
        scale = jnp.pad(scale, (0, C2p - C2))
        shift = jnp.pad(shift, (0, C2p - C2))
    scale = scale.reshape(1, C2p)
    shift = shift.reshape(1, C2p)

    itemsize = jnp.dtype(x.dtype).itemsize
    TH, tiled = _choose_row_tile(H, W, Win, C1, C2p, k, itemsize)
    use_halo = tiled and k > 1
    n_row_tiles = H // TH if tiled else 1
    main_rows = TH if tiled else Hin
    halo = k - 1

    kernel = functools.partial(_conv_bn_silu_kernel, k=k, TH=TH, W=W, use_halo=use_halo)

    in_specs = [pl.BlockSpec((1, main_rows, Win, C1), lambda n, h: (n, h, 0, 0))]
    operands = [x]
    if use_halo:
        # Halo rows [ (h+1)*TH, (h+1)*TH + k-1 ) of the same padded input; TH % (k-1) == 0 by
        # construction, so the element offset is expressed as a plain Blocked index.
        in_specs.append(
            pl.BlockSpec((1, halo, Win, C1),
                         lambda n, h: (n, (h + 1) * (TH // halo), 0, 0)))
        operands.append(x)
    in_specs += [
        pl.BlockSpec((k * k * C1, C2p), lambda n, h: (0, 0)),   # weights (VMEM resident)
        pl.BlockSpec((1, C2p), lambda n, h: (0, 0)),            # BN scale
        pl.BlockSpec((1, C2p), lambda n, h: (0, 0)),            # BN shift
    ]
    operands += [w, scale, shift]

    out_nhwc = pl.pallas_call(
        kernel,
        out_shape=jax.ShapeDtypeStruct((N, H, W, C2p), x_nchw.dtype),
        grid_spec=pltpu.PrefetchScalarGridSpec(
            num_scalar_prefetch=0,
            grid=(N, n_row_tiles),
            in_specs=in_specs,
            out_specs=pl.BlockSpec((1, TH, W, C2p), lambda n, h: (n, h, 0, 0)),
        ),
        compiler_params=pltpu.CompilerParams(
            dimension_semantics=("parallel", "parallel")),
    )(*operands)

    out = out_nhwc[..., :C2] if C2p != C2 else out_nhwc
    return jnp.transpose(out, (0, 3, 1, 2))          # back to NCHW


def conv_bn_silu_ref(x, weight, gamma, beta, running_mean, running_var, *, eps=1e-5):
    """Pure-JAX reference matching the PyTorch Conv module forward (eval-mode BN)."""
    k = weight.shape[-1]
    p = k // 2
    y = jax.lax.conv_general_dilated(
        x.astype(jnp.float32), weight.astype(jnp.float32),
        window_strides=(1, 1), padding=((p, p), (p, p)),
        dimension_numbers=("NCHW", "OIHW", "NCHW"),
        precision=jax.lax.Precision.HIGHEST)
    inv = jax.lax.rsqrt(running_var.astype(jnp.float32) + eps)
    y = (y - running_mean[None, :, None, None].astype(jnp.float32)) \
        * (gamma.astype(jnp.float32) * inv)[None, :, None, None] \
        + beta[None, :, None, None].astype(jnp.float32)
    y = y * (1.0 / (1.0 + jnp.exp(-y)))               # SiLU
    return y.astype(x.dtype)


if __name__ == "__main__":
    # Small shapes consistent with the module: (batch=2, c1=4, c2=8, 16x16 spatial), k=3 and k=1.
    N, C1, C2, H, W, K = 2, 4, 8, 16, 16, 3
    key = jax.random.PRNGKey(0)
    kx, kw3, kw1, kg, kb, km, kv = jax.random.split(key, 7)

    x = jax.random.normal(kx, (N, C1, H, W), dtype=jnp.float32)
    weight3 = jax.random.normal(kw3, (C2, C1, K, K), dtype=jnp.float32) * (1.0 / (C1 * K * K) ** 0.5)
    gamma = 1.0 + 0.1 * jax.random.normal(kg, (C2,), dtype=jnp.float32)
    beta = 0.1 * jax.random.normal(kb, (C2,), dtype=jnp.float32)
    running_mean = 0.1 * jax.random.normal(km, (C2,), dtype=jnp.float32)
    running_var = 1.0 + 0.1 * jax.random.uniform(kv, (C2,), dtype=jnp.float32)

    # k=3 ('same' pad) path
    out3 = jax.block_until_ready(conv_bn_silu(x, weight3, gamma, beta, running_mean, running_var))
    ref3 = conv_bn_silu_ref(x, weight3, gamma, beta, running_mean, running_var)
    assert out3.shape == ref3.shape and out3.dtype == ref3.dtype
    assert jnp.allclose(out3, ref3, atol=2e-2, rtol=2e-2), \
        f"k=3 mismatch vs reference (max abs err {jnp.max(jnp.abs(out3 - ref3))})"

    # default Conv args path (k=1, pointwise conv)
    weight1 = jax.random.normal(kw1, (C2, C1, 1, 1), dtype=jnp.float32) * 0.5
    out1 = jax.block_until_ready(conv_bn_silu(x, weight1, gamma, beta, running_mean, running_var))
    ref1 = conv_bn_silu_ref(x, weight1, gamma, beta, running_mean, running_var)
    assert jnp.allclose(out1, ref1, atol=2e-2, rtol=2e-2), \
        f"k=1 mismatch vs reference (max abs err {jnp.max(jnp.abs(out1 - ref1))})"

    print("KERNEL_OK")
</pallas_src>

<mosaic_0001>
module attributes {stable_mosaic.version = 11 : i64} {
  func.func @_conv_bn_silu_kernel(%arg0: i32, %arg1: i32, %arg2: memref<1x8x18x4xf32, #tpu.memory_space<vmem>>, %arg3: memref<1x2x18x4xf32, #tpu.memory_space<vmem>>, %arg4: memref<36x128xf32, #tpu.memory_space<vmem>>, %arg5: memref<1x128xf32, #tpu.memory_space<vmem>>, %arg6: memref<1x128xf32, #tpu.memory_space<vmem>>, %arg7: memref<1x8x16x128xf32, #tpu.memory_space<vmem>>) attributes {dimension_semantics = [#tpu.dimension_semantics<parallel>, #tpu.dimension_semantics<parallel>], iteration_bounds = array<i64: 2, 2>, scalar_prefetch = 0 : i64, scratch_operands = 0 : i64, tpu.core_type = #tpu.core_type<tc>, window_params = [{transform_indices = @transform_0, window_bounds = array<i64: 1, 8, 18, 4>}, {transform_indices = @transform_1, window_bounds = array<i64: 1, 2, 18, 4>}, {pipeline_mode = #tpu.pipeline_mode<synchronous>, transform_indices = @transform_2, window_bounds = array<i64: 36, 128>}, {pipeline_mode = #tpu.pipeline_mode<synchronous>, transform_indices = @transform_3, window_bounds = array<i64: 1, 128>}, {pipeline_mode = #tpu.pipeline_mode<synchronous>, transform_indices = @transform_4, window_bounds = array<i64: 1, 128>}, {transform_indices = @transform_5, window_bounds = array<i64: 1, 8, 16, 128>}]} {
    %c0 = arith.constant 0 : index
    %c0_0 = arith.constant 0 : index
    %c0_1 = arith.constant 0 : index
    %c0_2 = arith.constant 0 : index
    %0 = vector.load %arg2[%c0, %c0_0, %c0_1, %c0_2] : memref<1x8x18x4xf32, #tpu.memory_space<vmem>>, vector<1x8x18x4xf32>
    %1 = vector.shape_cast %0 : vector<1x8x18x4xf32> to vector<8x18x4xf32>
    %c0_3 = arith.constant 0 : index
    %c0_4 = arith.constant 0 : index
    %c0_5 = arith.constant 0 : index
    %c0_6 = arith.constant 0 : index
    %2 = vector.load %arg3[%c0_3, %c0_4, %c0_5, %c0_6] : memref<1x2x18x4xf32, #tpu.memory_space<vmem>>, vector<1x2x18x4xf32>
    %3 = vector.shape_cast %2 : vector<1x2x18x4xf32> to vector<2x18x4xf32>
    %4 = tpu.concatenate %1, %3 in 0 : vector<8x18x4xf32>, vector<2x18x4xf32> -> vector<10x18x4xf32>
    %5 = vector.extract_strided_slice %4 {offsets = [0, 0, 0], sizes = [10, 16, 4], strides = [1, 1, 1]} : vector<10x18x4xf32> to vector<10x16x4xf32>
    %6 = vector.extract_strided_slice %5 {offsets = [0, 0, 0], sizes = [8, 16, 4], strides = [1, 1, 1]} : vector<10x16x4xf32> to vector<8x16x4xf32>
    %7 = vector.extract_strided_slice %5 {offsets = [1, 0, 0], sizes = [8, 16, 4], strides = [1, 1, 1]} : vector<10x16x4xf32> to vector<8x16x4xf32>
    %8 = vector.extract_strided_slice %5 {offsets = [2, 0, 0], sizes = [8, 16, 4], strides = [1, 1, 1]} : vector<10x16x4xf32> to vector<8x16x4xf32>
    %9 = vector.extract_strided_slice %4 {offsets = [0, 1, 0], sizes = [10, 16, 4], strides = [1, 1, 1]} : vector<10x18x4xf32> to vector<10x16x4xf32>
    %10 = vector.extract_strided_slice %9 {offsets = [0, 0, 0], sizes = [8, 16, 4], strides = [1, 1, 1]} : vector<10x16x4xf32> to vector<8x16x4xf32>
    %11 = vector.extract_strided_slice %9 {offsets = [1, 0, 0], sizes = [8, 16, 4], strides = [1, 1, 1]} : vector<10x16x4xf32> to vector<8x16x4xf32>
    %12 = vector.extract_strided_slice %9 {offsets = [2, 0, 0], sizes = [8, 16, 4], strides = [1, 1, 1]} : vector<10x16x4xf32> to vector<8x16x4xf32>
    %13 = vector.extract_strided_slice %4 {offsets = [0, 2, 0], sizes = [10, 16, 4], strides = [1, 1, 1]} : vector<10x18x4xf32> to vector<10x16x4xf32>
    %14 = vector.extract_strided_slice %13 {offsets = [0, 0, 0], sizes = [8, 16, 4], strides = [1, 1, 1]} : vector<10x16x4xf32> to vector<8x16x4xf32>
    %15 = vector.extract_strided_slice %13 {offsets = [1, 0, 0], sizes = [8, 16, 4], strides = [1, 1, 1]} : vector<10x16x4xf32> to vector<8x16x4xf32>
    %16 = vector.extract_strided_slice %13 {offsets = [2, 0, 0], sizes = [8, 16, 4], strides = [1, 1, 1]} : vector<10x16x4xf32> to vector<8x16x4xf32>
    %17 = tpu.concatenate %6, %7, %8, %10, %11, %12, %14, %15, %16 in 2 : vector<8x16x4xf32>, vector<8x16x4xf32>, vector<8x16x4xf32>, vector<8x16x4xf32>, vector<8x16x4xf32>, vector<8x16x4xf32>, vector<8x16x4xf32>, vector<8x16x4xf32>, vector<8x16x4xf32> -> vector<8x16x36xf32>
    %18 = vector.shape_cast %17 : vector<8x16x36xf32> to vector<128x36xf32>
    %c0_7 = arith.constant 0 : index
    %c0_8 = arith.constant 0 : index
    %19 = vector.load %arg4[%c0_7, %c0_8] : memref<36x128xf32, #tpu.memory_space<vmem>>, vector<36x128xf32>
    %cst = arith.constant dense<0.000000e+00> : vector<128x128xf32>
    %20 = tpu.matmul %18, %19, %cst {dimension_numbers = #tpu.dot_dimension_numbers<[1], [0], [0], [1], [0, 0, 1, 1], [], []>} : vector<128x36xf32>, vector<36x128xf32>, vector<128x128xf32> -> vector<128x128xf32>
    %c0_9 = arith.constant 0 : index
    %c0_10 = arith.constant 0 : index
    %21 = vector.load %arg5[%c0_9, %c0_10] : memref<1x128xf32, #tpu.memory_space<vmem>>, vector<1x128xf32>
    %22 = vector.broadcast %21 : vector<1x128xf32> to vector<128x128xf32>
    %23 = arith.mulf %20, %22 : vector<128x128xf32>
    %c0_11 = arith.constant 0 : index
    %c0_12 = arith.constant 0 : index
    %24 = vector.load %arg6[%c0_11, %c0_12] : memref<1x128xf32, #tpu.memory_space<vmem>>, vector<1x128xf32>
    %25 = vector.broadcast %24 : vector<1x128xf32> to vector<128x128xf32>
    %26 = arith.addf %23, %25 : vector<128x128xf32>
    %cst_13 = arith.constant 0.000000e+00 : f32
    %27 = vector.broadcast %cst_13 : f32 to vector<128x128xf32>
    %28 = arith.subf %27, %26 : vector<128x128xf32>
    %29 = math.exp %28 : vector<128x128xf32>
    %cst_14 = arith.constant 1.000000e+00 : f32
    %30 = vector.broadcast %cst_14 : f32 to vector<128x128xf32>
    %31 = arith.addf %30, %29 : vector<128x128xf32>
    %32 = tpu.reciprocal %31 {approx = true} : vector<128x128xf32> -> vector<128x128xf32>
    %33 = arith.mulf %26, %32 : vector<128x128xf32>
    %34 = vector.shape_cast %33 : vector<128x128xf32> to vector<8x16x128xf32>
    %c0_15 = arith.constant 0 : index
    %c0_16 = arith.constant 0 : index
    %c0_17 = arith.constant 0 : index
    %c0_18 = arith.constant 0 : index
    %35 = vector.load %arg7[%c0_15, %c0_16, %c0_17, %c0_18] : memref<1x8x16x128xf32, #tpu.memory_space<vmem>>, vector<1x8x16x128xf32>
    %36 = vector.shape_cast %35 : vector<1x8x16x128xf32> to vector<8x16x128xf32>
    %37 = vector.shape_cast %34 : vector<8x16x128xf32> to vector<1x8x16x128xf32>
    tpu.vector_store %arg7[%c0_15, %c0_16, %c0_17, %c0_18], %37 {strides = array<i32>} : memref<1x8x16x128xf32, #tpu.memory_space<vmem>>, vector<1x8x16x128xf32>,
    return
  }
  func.func @transform_0(%arg0: i32, %arg1: i32) -> (i32, i32, i32, i32) {
    %c0_i32 = arith.constant 0 : i32
    %c0_i32_0 = arith.constant 0 : i32
    %c0_i32_1 = arith.constant 0 : i32
    return %arg0, %arg1, %c0_i32, %c0_i32_0 : i32, i32, i32, i32
  }
  func.func @transform_1(%arg0: i32, %arg1: i32) -> (i32, i32, i32, i32) {
    %c1_i32 = arith.constant 1 : i32
    %0 = arith.addi %arg1, %c1_i32 : i32
    %c4_i32 = arith.constant 4 : i32
    %1 = arith.muli %0, %c4_i32 : i32
    %c0_i32 = arith.constant 0 : i32
    %c0_i32_0 = arith.constant 0 : i32
    %c0_i32_1 = arith.constant 0 : i32
    return %arg0, %1, %c0_i32, %c0_i32_0 : i32, i32, i32, i32
  }
  func.func @transform_2(%arg0: i32, %arg1: i32) -> (i32, i32) {
    %c0_i32 = arith.constant 0 : i32
    %c0_i32_0 = arith.constant 0 : i32
    %c0_i32_1 = arith.constant 0 : i32
    return %c0_i32, %c0_i32_0 : i32, i32
  }
  func.func @transform_3(%arg0: i32, %arg1: i32) -> (i32, i32) {
    %c0_i32 = arith.constant 0 : i32
    %c0_i32_0 = arith.constant 0 : i32
    %c0_i32_1 = arith.constant 0 : i32
    return %c0_i32, %c0_i32_0 : i32, i32
  }
  func.func @transform_4(%arg0: i32, %arg1: i32) -> (i32, i32) {
    %c0_i32 = arith.constant 0 : i32
    %c0_i32_0 = arith.constant 0 : i32
    %c0_i32_1 = arith.constant 0 : i32
    return %c0_i32, %c0_i32_0 : i32, i32
  }
  func.func @transform_5(%arg0: i32, %arg1: i32) -> (i32, i32, i32, i32) {
    %c0_i32 = arith.constant 0 : i32
    %c0_i32_0 = arith.constant 0 : i32
    %c0_i32_1 = arith.constant 0 : i32
    return %arg0, %arg1, %c0_i32, %c0_i32_0 : i32, i32, i32, i32
  }
}

</mosaic_0001>

<llo_original>
// kernel: tpu_custom_call.1
$region0: #{tpu_custom_call.1}
  #allocation0 [shape = 'u32[]', space=smem, size = 0x4, offset = 0x4, fixed_abs, tag = 'smem constant byte address 0x4 - core index']
  #allocation1 [shape = 'u32[144,128]{1,0:T(1,128)}', space=vmem, size = 0x12000, scoped, tag = 'internal scratch']
  %s0 = inlined_call_operand.vmem [shape: f32[2,18,18,4], index: 0, kind: input, shape index: {}]
  %s1 = inlined_call_operand.vmem [shape: f32[2,18,18,4], index: 1, kind: input, shape index: {}]
  %s2 = inlined_call_operand.vmem [shape: f32[36,128], index: 2, kind: input, shape index: {}]
  %s3 = inlined_call_operand.vmem [shape: f32[1,128], index: 3, kind: input, shape index: {}]
  %s4 = inlined_call_operand.vmem [shape: f32[1,128], index: 4, kind: input, shape index: {}]
  %s5 = inlined_call_operand.hbm [shape: f32[2,16,16,128], index: 5, kind: output, shape index: {}]
  %s6 = sld [smem:[#allocation0]]
  $region53: #{tpu_custom_call.1} parent=0
    _
  %s8 = ssub.s32 1, %s6
  %s9 = scalar_select 0, %s8, %s6
  $region1: #{tpu_custom_call.1} parent=0
    #allocation2 [shape = 'u8[131072]{0}', space=vmem, size = 0x20000, scoped, tag = 'output window, operand 0']
    #allocation3 [shape = 's32[2]{0}', space=sflag, size = 0x8, scoped, tag = 'scoped memory for tpu_custom_call.1']
    %10 = vsyncpa [#allocation3], 0
    %s11 = scalar_lea.sflag [#allocation3], 1
    %12 = vsyncpa %s11, 0
    loop: start=0, step=1, limit=6
    $region2: #{tpu_custom_call.1} parent=1 // loop_pre_header
      _
    $region3: #{tpu_custom_call.1} parent=1 // loop_header
      %s14 = sphi 0, %s18
      %p15 = scmp.ge.s32.totalorder %s14, 6
      %s21 = sphi 0, %s33
      %s22 = sphi 0, %s29
      %s23 = sphi 0, %s21
      %s24 = sphi 0, %s22
      %s25 = sphi 0, %s23
      %s26 = sphi 0, %s24
      %s38 = sphi 0, %s40
      %s41 = sphi 0, %s38
      %s42 = sphi 0, %s41
      %s58 = sphi 0, %s42
      %s70 = sphi 0, %s72
      %s73 = sphi 0, %s70
      %s74 = sphi 0, %s73
      %s90 = sphi 0, %s74
      %s94 = sphi 0, %s94
      %s96 = sphi 0, %s94
      %s97 = sphi 0, %s96
      %s111 = sphi 0, %s97
      %s115 = sphi 0, %s115
      %s117 = sphi 0, %s115
      %s118 = sphi 0, %s117
      %s132 = sphi 0, %s118
      %s136 = sphi 0, %s136
      %s138 = sphi 0, %s136
      %s139 = sphi 0, %s138
      %s153 = sphi 0, %s139
      %s161 = sphi 0, %s163
      %s164 = sphi 0, %s161
      %s165 = sphi 0, %s164
      %s181 = sphi 0, %s165
    $region4: #{tpu_custom_call.1} parent=1 // loop_header_branch
      %17 = sbr.rel (%p15) target = $region8
    $region5: #{tpu_custom_call.1} parent=1 // loop_body
      %s19 = ssub.s32 %s14, 1
      %s20 = ssub.s32 %s14, 2
      %s27 = sadd.s32 1, %s22
      %p28 = scmp.ge.s32.totalorder %s27, 2
      %s29 = scalar_select %p28, 0, %s27
      %s30 = sadd.s32 1, %s21
      %s31 = scalar_select %p28, %s30, %s21
      %p32 = scmp.ge.s32.totalorder %s31, 2
      %s33 = scalar_select %p32, 0, %s31
      %s34 = ssub.s32 %s21, %s33
      %s35 = ssub.s32 %s22, %s29
      %s36 = sor.u32 %s34, %s35
      %p37 = scmp.eq.s32.totalorder %s36, 0
      %s39 = sadd.s32 %s38, 1
      %s40 = scalar_select %p37, %s38, %s39
      %p43 = pneg %p37
      %p44 = scmp.eq.s32.totalorder %s14, 3
      %p45 = por %p43, %p44
      %p46 = scmp.ne.s32.totalorder %s38, %s41
      %p47 = scmp.eq.s32.totalorder %s14, 0
      %p48 = por %p46, %p47
      %p49 = scmp.ne.s32.totalorder %s38, %s41
      %p50 = scmp.eq.s32.totalorder %s19, 3
      %p51 = por %p49, %p50
      %p52 = scmp.ne.s32.totalorder %s41, %s42
      %p53 = scmp.eq.s32.totalorder %s19, 0
      %p54 = por %p52, %p53
      %p55 = scmp.ne.s32.totalorder %s41, %s42
      %p56 = scmp.eq.s32.totalorder %s20, 3
      %p57 = por %p55, %p56
      %p59 = scmp.ne.s32.totalorder %s42, %s58
      %p60 = scmp.eq.s32.totalorder %s20, 0
      %p61 = por %p59, %p60
      %s62 = sadd.s32 %s22, 1
      %s63 = smul.u32 %s62, 4
      %s64 = sadd.s32 %s29, 1
      %s65 = smul.u32 %s64, 4
      %s66 = ssub.s32 %s21, %s33
      %s67 = ssub.s32 %s63, %s65
      %s68 = sor.u32 %s66, %s67
      %p69 = scmp.eq.s32.totalorder %s68, 0
      %s71 = sadd.s32 %s70, 1
      %s72 = scalar_select %p69, %s70, %s71
      %p75 = pneg %p69
      %p76 = scmp.eq.s32.totalorder %s14, 3
      %p77 = por %p75, %p76
      %p78 = scmp.ne.s32.totalorder %s70, %s73
      %p79 = scmp.eq.s32.totalorder %s14, 0
      %p80 = por %p78, %p79
      %p81 = scmp.ne.s32.totalorder %s70, %s73
      %p82 = scmp.eq.s32.totalorder %s19, 3
      %p83 = por %p81, %p82
      %p84 = scmp.ne.s32.totalorder %s73, %s74
      %p85 = scmp.eq.s32.totalorder %s19, 0
      %p86 = por %p84, %p85
      %p87 = scmp.ne.s32.totalorder %s73, %s74
      %p88 = scmp.eq.s32.totalorder %s20, 3
      %p89 = por %p87, %p88
      %p91 = scmp.ne.s32.totalorder %s74, %s90
      %p92 = scmp.eq.s32.totalorder %s20, 0
      %p93 = por %p91, %p92
      %s95 = sadd.s32 %s94, 1
      %p98 = scmp.eq.s32.totalorder %s14, 3
      %p99 = scmp.ne.s32.totalorder %s94, %s96
      %p100 = scmp.eq.s32.totalorder %s14, 0
      %p101 = por %p99, %p100
      %p102 = scmp.ne.s32.totalorder %s94, %s96
      %p103 = scmp.eq.s32.totalorder %s19, 3
      %p104 = por %p102, %p103
      %p105 = scmp.ne.s32.totalorder %s96, %s97
      %p106 = scmp.eq.s32.totalorder %s19, 0
      %p107 = por %p105, %p106
      %p108 = scmp.ne.s32.totalorder %s96, %s97
      %p109 = scmp.eq.s32.totalorder %s20, 3
      %p110 = por %p108, %p109
      %p112 = scmp.ne.s32.totalorder %s97, %s111
      %p113 = scmp.eq.s32.totalorder %s20, 0
      %p114 = por %p112, %p113
      %s116 = sadd.s32 %s115, 1
      %p119 = scmp.eq.s32.totalorder %s14, 3
      %p120 = scmp.ne.s32.totalorder %s115, %s117
      %p121 = scmp.eq.s32.totalorder %s14, 0
      %p122 = por %p120, %p121
      %p123 = scmp.ne.s32.totalorder %s115, %s117
      %p124 = scmp.eq.s32.totalorder %s19, 3
      %p125 = por %p123, %p124
      %p126 = scmp.ne.s32.totalorder %s117, %s118
      %p127 = scmp.eq.s32.totalorder %s19, 0
      %p128 = por %p126, %p127
      %p129 = scmp.ne.s32.totalorder %s117, %s118
      %p130 = scmp.eq.s32.totalorder %s20, 3
      %p131 = por %p129, %p130
      %p133 = scmp.ne.s32.totalorder %s118, %s132
      %p134 = scmp.eq.s32.totalorder %s20, 0
      %p135 = por %p133, %p134
      %s137 = sadd.s32 %s136, 1
      %p140 = scmp.eq.s32.totalorder %s14, 3
      %p141 = scmp.ne.s32.totalorder %s136, %s138
      %p142 = scmp.eq.s32.totalorder %s14, 0
      %p143 = por %p141, %p142
      %p144 = scmp.ne.s32.totalorder %s136, %s138
      %p145 = scmp.eq.s32.totalorder %s19, 3
      %p146 = por %p144, %p145
      %p147 = scmp.ne.s32.totalorder %s138, %s139
      %p148 = scmp.eq.s32.totalorder %s19, 0
      %p149 = por %p147, %p148
      %p150 = scmp.ne.s32.totalorder %s138, %s139
      %p151 = scmp.eq.s32.totalorder %s20, 3
      %p152 = por %p150, %p151
      %p154 = scmp.ne.s32.totalorder %s139, %s153
      %p155 = scmp.eq.s32.totalorder %s20, 0
      %p156 = por %p154, %p155
      %s157 = ssub.s32 %s21, %s33
      %s158 = ssub.s32 %s22, %s29
      %s159 = sor.u32 %s157, %s158
      %p160 = scmp.eq.s32.totalorder %s159, 0
      %s162 = sadd.s32 %s161, 1
      %s163 = scalar_select %p160, %s161, %s162
      %p166 = pneg %p160
      %p167 = scmp.eq.s32.totalorder %s14, 3
      %p168 = por %p166, %p167
      %p169 = scmp.ne.s32.totalorder %s161, %s164
      %p170 = scmp.eq.s32.totalorder %s14, 0
      %p171 = por %p169, %p170
      %p172 = scmp.ne.s32.totalorder %s161, %s164
      %p173 = scmp.eq.s32.totalorder %s19, 3
      %p174 = por %p172, %p173
      %p175 = scmp.ne.s32.totalorder %s164, %s165
      %p176 = scmp.eq.s32.totalorder %s19, 0
      %p177 = por %p175, %p176
      %p178 = scmp.ne.s32.totalorder %s164, %s165
      %p179 = scmp.eq.s32.totalorder %s20, 3
      %p180 = por %p178, %p179
      %p182 = scmp.ne.s32.totalorder %s165, %s181
      %p183 = scmp.eq.s32.totalorder %s20, 0
      %p184 = por %p182, %p183
      %p185 = scmp.le.s32.totalorder 1, %s14
      %p186 = scmp.lt.s32.totalorder %s14, 5
      %p187 = pnand %p185, %p186
      %p188 = pneg %p187
      // Predicated region
      $region9: #{tpu_custom_call.1} parent=5 // pred_check
        _
      $region10: #{tpu_custom_call.1} parent=5 // pred_check_branch
        %190 = sbr.rel (%p187) target = $region12
      $region11: #{tpu_custom_call.1} parent=5 // pred_region
        %s191 = ssub.s32 %s14, 1
        // Predicated region
        $region13: #{tpu_custom_call.1} parent=11 // pred_check
          %p192 = pneg %p107
        $region14: #{tpu_custom_call.1} parent=11 // pred_check_branch
          %194 = sbr.rel (%p192) target = $region16
        $region15: #{tpu_custom_call.1} parent=11 // pred_region
          _
        $region16: #{tpu_custom_call.1} parent=11 // pred_fallthru
          _
        // Predicated region
        $region17: #{tpu_custom_call.1} parent=11 // pred_check
          %p195 = pneg %p128
        $region18: #{tpu_custom_call.1} parent=11 // pred_check_branch
          %197 = sbr.rel (%p195) target = $region20
        $region19: #{tpu_custom_call.1} parent=11 // pred_region
          _
        $region20: #{tpu_custom_call.1} parent=11 // pred_fallthru
          _
        // Predicated region
        $region21: #{tpu_custom_call.1} parent=11 // pred_check
          %p198 = pneg %p149
        $region22: #{tpu_custom_call.1} parent=11 // pred_check_branch
          %200 = sbr.rel (%p198) target = $region24
        $region23: #{tpu_custom_call.1} parent=11 // pred_region
          _
        $region24: #{tpu_custom_call.1} parent=11 // pred_fallthru
          _
      $region12: #{tpu_custom_call.1} parent=5 // pred_fallthru
        _
      %p201 = scmp.lt.s32.totalorder %s14, 4
      // Predicated region
      $region25: #{tpu_custom_call.1} parent=5 // pred_check
        %p202 = pneg %p201
      $region26: #{tpu_custom_call.1} parent=5 // pred_check_branch
        %204 = sbr.rel (%p202) target = $region28
      $region27: #{tpu_custom_call.1} parent=5 // pred_region
        // Predicated region
        $region29: #{tpu_custom_call.1} parent=27 // pred_check
          %p205 = pneg %p48
        $region30: #{tpu_custom_call.1} parent=27 // pred_check_branch
          %207 = sbr.rel (%p205) target = $region32
        $region31: #{tpu_custom_call.1} parent=27 // pred_region
          %s208 = smul.u32 8, %s22
          %s209 = ssub.s32 18, %s208
          %p210 = scmp.lt.s32.totalorder %s209, 8
          %s211 = scalar_select %p210, %s209, 8
          %s212 = smul.u32 128, %s211
          %s213 = smul.u32 %s212, 3
          %p214 = scmp.lt.s32.totalorder %s21, 1
          %s215 = scalar_select %p214, %s21, 1
          %p216 = scmp.lt.s32.totalorder %s208, 17
          %s217 = scalar_select %p216, %s208, 17
          %s218 = smul.addr %s217, 3
          %s219 = smul.addr %s215, 54
          %s220 = sadd.s32 %s218, %s219
          %s221 = smul.addr %s220, 8
          %s222 = scalar_lea.vmem %s0, %s221
          %s223 = smul.u32 8, %s22
          %s224 = ssub.s32 18, %s223
          %p225 = scmp.lt.s32.totalorder %s224, 8
          %s226 = scalar_select %p225, %s224, 8
          %s227 = smul.u32 128, %s226
          %s228 = smul.u32 %s227, 3
        $region32: #{tpu_custom_call.1} parent=27 // pred_fallthru
          _
        // Predicated region
        $region33: #{tpu_custom_call.1} parent=27 // pred_check
          %p229 = pneg %p80
        $region34: #{tpu_custom_call.1} parent=27 // pred_check_branch
          %231 = sbr.rel (%p229) target = $region36
        $region35: #{tpu_custom_call.1} parent=27 // pred_region
          %s232 = sadd.s32 %s22, 1
          %s233 = smul.u32 %s232, 4
          %s234 = smul.u32 2, %s233
          %p235 = scmp.lt.s32.totalorder %s21, 1
          %s236 = scalar_select %p235, %s21, 1
          %p237 = scmp.lt.s32.totalorder %s234, 17
          %s238 = scalar_select %p237, %s234, 17
          %s239 = smul.addr %s238, 3
          %s240 = smul.addr %s236, 54
          %s241 = sadd.s32 %s239, %s240
          %s242 = smul.addr %s241, 8
          %s243 = scalar_lea.vmem %s1, %s242
          %s244 = sadd.s32 %s22, 1
          %s245 = smul.u32 %s244, 4
          %s246 = smul.u32 2, %s245
        $region36: #{tpu_custom_call.1} parent=27 // pred_fallthru
          _
      $region28: #{tpu_custom_call.1} parent=5 // pred_fallthru
        _
      %p247 = scmp.le.s32.totalorder 1, %s14
      %p248 = scmp.lt.s32.totalorder %s14, 5
      %p249 = pnand %p247, %p248
      %p250 = pneg %p249
      // Predicated region
      $region37: #{tpu_custom_call.1} parent=5 // pred_check
        _
      $region38: #{tpu_custom_call.1} parent=5 // pred_check_branch
        %252 = sbr.rel (%p249) target = $region40
      $region39: #{tpu_custom_call.1} parent=5 // pred_region
        %s253 = ssub.s32 %s14, 1
        %s254 = smul.u32 8, %s24
        %s255 = ssub.s32 18, %s254
        %p256 = scmp.lt.s32.totalorder %s255, 8
        %s257 = scalar_select %p256, %s255, 8
        %s258 = smul.u32 128, %s257
        %s259 = smul.u32 %s258, 3
        %p260 = scmp.lt.s32.totalorder %s23, 1
        %s261 = scalar_select %p260, %s23, 1
        %p262 = scmp.lt.s32.totalorder %s254, 17
        %s263 = scalar_select %p262, %s254, 17
        %s264 = smul.addr %s263, 3
        %s265 = smul.addr %s261, 54
        %s266 = sadd.s32 %s264, %s265
        %s267 = smul.addr %s266, 8
        %s268 = scalar_lea.vmem %s0, %s267
        %p269 = pneg %p54
        %p270 = pneg %p51
        %s271 = sadd.s32 %s24, 1
        %s272 = smul.u32 %s271, 4
        %s273 = smul.u32 2, %s272
        %p274 = scmp.lt.s32.totalorder %s23, 1
        %s275 = scalar_select %p274, %s23, 1
        %p276 = scmp.lt.s32.totalorder %s273, 17
        %s277 = scalar_select %p276, %s273, 17
        %s278 = smul.addr %s277, 3
        %s279 = smul.addr %s275, 54
        %s280 = sadd.s32 %s278, %s279
        %s281 = smul.addr %s280, 8
        %s282 = scalar_lea.vmem %s1, %s281
        %p283 = pneg %p86
        %p284 = pneg %p83
        %p285 = pneg %p107
        %p286 = pneg %p104
        %p287 = pneg %p128
        %p288 = pneg %p125
        %p289 = pneg %p149
        %p290 = pneg %p146
        %p291 = pneg %p177
        %p292 = pneg %p174
        %s293 = sand.u32 %s164, 1
        %s294 = scalar_lea.sflag [#allocation3], %s293
        %s295 = sand.u32 %s164, 1
        %s296 = smul.addr %s295, 128
        %s297 = scalar_lea.vmem [#allocation2], %s296
        %s298 = smul.u32 8, %s24
        %s299 = ssub.s32 18, %s298
        %p300 = scmp.lt.s32.totalorder %s299, 8
        %s301 = scalar_select %p300, %s299, 8
        %s302 = smul.u32 128, %s301
        %s303 = smul.u32 %s302, 3
        %p304 = scmp.lt.s32.totalorder %s23, 1
        %s305 = scalar_select %p304, %s23, 1
        %p306 = scmp.lt.s32.totalorder %s298, 17
        %s307 = scalar_select %p306, %s298, 17
        %s308 = smul.addr %s307, 3
        %s309 = smul.addr %s305, 54
        %s310 = sadd.s32 %s308, %s309
        %s311 = smul.addr %s310, 8
        %s312 = scalar_lea.vmem %s0, %s311
        %s313 = smul.u32 8, %s24
        %s314 = ssub.s32 18, %s313
        %p315 = scmp.lt.s32.totalorder %s314, 8
        %s316 = scalar_select %p315, %s314, 8
        %s317 = smul.u32 128, %s316
        %s318 = smul.u32 %s317, 3
        %s319 = sadd.s32 %s24, 1
        %s320 = smul.u32 %s319, 4
        %s321 = smul.u32 2, %s320
        %p322 = scmp.lt.s32.totalorder %s23, 1
        %s323 = scalar_select %p322, %s23, 1
        %p324 = scmp.lt.s32.totalorder %s321, 17
        %s325 = scalar_select %p324, %s321, 17
        %s326 = smul.addr %s325, 3
        %s327 = smul.addr %s323, 54
        %s328 = sadd.s32 %s326, %s327
        %s329 = smul.addr %s328, 8
        %s330 = scalar_lea.vmem %s1, %s329
        %s331 = sadd.s32 %s24, 1
        %s332 = smul.u32 %s331, 4
        %s333 = smul.u32 2, %s332
        %s334 = smul.u32 8, %s24
        %v335 = vld [vmem:[%s312] sm:$0xff]
        %v336 = vld [vmem:[%s312 + $0x8] sm:$0xff]
        %v337 = vld [vmem:[%s312 + $0x10] sm:$0x3]
        %v338 = vld [vmem:[%s312 + $0x18] sm:$0xff]
        %v339 = vld [vmem:[%s312 + $0x20] sm:$0xff]
        %v340 = vld [vmem:[%s312 + $0x28] sm:$0x3]
        %v341 = vld [vmem:[%s312 + $0x30] sm:$0xff]
        %v342 = vld [vmem:[%s312 + $0x38] sm:$0xff]
        %v343 = vld [vmem:[%s312 + $0x40] sm:$0x3]
        %v344 = vld [vmem:[%s312 + $0x48] sm:$0xff]
        %v345 = vld [vmem:[%s312 + $0x50] sm:$0xff]
        %v346 = vld [vmem:[%s312 + $0x58] sm:$0x3]
        %v347 = vld [vmem:[%s312 + $0x60] sm:$0xff]
        %v348 = vld [vmem:[%s312 + $0x68] sm:$0xff]
        %v349 = vld [vmem:[%s312 + $0x70] sm:$0x3]
        %v350 = vld [vmem:[%s312 + $0x78] sm:$0xff]
        %v351 = vld [vmem:[%s312 + $0x80] sm:$0xff]
        %v352 = vld [vmem:[%s312 + $0x88] sm:$0x3]
        %v353 = vld [vmem:[%s312 + $0x90] sm:$0xff]
        %v354 = vld [vmem:[%s312 + $0x98] sm:$0xff]
        %v355 = vld [vmem:[%s312 + $0xa0] sm:$0x3]
        %v356 = vld [vmem:[%s312 + $0xa8] sm:$0xff]
        %v357 = vld [vmem:[%s312 + $0xb0] sm:$0xff]
        %v358 = vld [vmem:[%s312 + $0xb8] sm:$0x3]
        %v359 = vld [vmem:[%s330] sm:$0xff]
        %v360 = vld [vmem:[%s330 + $0x8] sm:$0xff]
        %v361 = vld [vmem:[%s330 + $0x10] sm:$0x3]
        %v362 = vld [vmem:[%s330 + $0x18] sm:$0xff]
        %v363 = vld [vmem:[%s330 + $0x20] sm:$0xff]
        %v364 = vld [vmem:[%s330 + $0x28] sm:$0x3]
        %381 = vrot.lane.b32.xlu0 %v338, 4
        %v382 = vpop.permute.xlu0 %381
        %383 = vrot.lane.b32.xlu0 %v339, 4
        %v384 = vpop.permute.xlu0 %383
        %385 = vrot.lane.b32.xlu0 %v341, 4
        %v386 = vpop.permute.xlu0 %385
        %387 = vrot.lane.b32.xlu0 %v342, 4
        %v388 = vpop.permute.xlu0 %387
        %389 = vrot.lane.b32.xlu0 %v344, 4
        %v390 = vpop.permute.xlu0 %389
        %391 = vrot.lane.b32.xlu0 %v345, 4
        %v392 = vpop.permute.xlu0 %391
        %393 = vrot.lane.b32.xlu0 %v347, 4
        %v394 = vpop.permute.xlu0 %393
        %395 = vrot.lane.b32.xlu0 %v348, 4
        %v396 = vpop.permute.xlu0 %395
        %397 = vrot.lane.b32.xlu0 %v350, 4
        %v398 = vpop.permute.xlu0 %397
        %399 = vrot.lane.b32.xlu0 %v351, 4
        %v400 = vpop.permute.xlu0 %399
        %401 = vrot.lane.b32.xlu0 %v353, 4
        %v402 = vpop.permute.xlu0 %401
        %403 = vrot.lane.b32.xlu0 %v354, 4
        %v404 = vpop.permute.xlu0 %403
        %405 = vrot.lane.b32.xlu0 %v356, 4
        %v406 = vpop.permute.xlu0 %405
        %407 = vrot.lane.b32.xlu0 %v357, 4
        %v408 = vpop.permute.xlu0 %407
        %409 = vrot.lane.b32.xlu0 %v359, 4
        %v410 = vpop.permute.xlu0 %409
        %411 = vrot.lane.b32.xlu0 %v360, 4
        %v412 = vpop.permute.xlu0 %411
        %431 = vrot.lane.b32.xlu0 %v341, 8
        %v432 = vpop.permute.xlu0 %431
        %433 = vrot.lane.b32.xlu0 %v342, 8
        %v434 = vpop.permute.xlu0 %433
        %435 = vrot.lane.b32.xlu0 %v344, 8
        %v436 = vpop.permute.xlu0 %435
        %437 = vrot.lane.b32.xlu0 %v345, 8
        %v438 = vpop.permute.xlu0 %437
        %439 = vrot.lane.b32.xlu0 %v347, 8
        %v440 = vpop.permute.xlu0 %439
        %441 = vrot.lane.b32.xlu0 %v348, 8
        %v442 = vpop.permute.xlu0 %441
        %443 = vrot.lane.b32.xlu0 %v350, 8
        %v444 = vpop.permute.xlu0 %443
        %445 = vrot.lane.b32.xlu0 %v351, 8
        %v446 = vpop.permute.xlu0 %445
        %447 = vrot.lane.b32.xlu0 %v353, 8
        %v448 = vpop.permute.xlu0 %447
        %449 = vrot.lane.b32.xlu0 %v354, 8
        %v450 = vpop.permute.xlu0 %449
        %451 = vrot.lane.b32.xlu0 %v356, 8
        %v452 = vpop.permute.xlu0 %451
        %453 = vrot.lane.b32.xlu0 %v357, 8
        %v454 = vpop.permute.xlu0 %453
        %455 = vrot.lane.b32.xlu0 %v359, 8
        %v456 = vpop.permute.xlu0 %455
        %457 = vrot.lane.b32.xlu0 %v360, 8
        %v458 = vpop.permute.xlu0 %457
        %459 = vrot.lane.b32.xlu0 %v362, 8
        %v460 = vpop.permute.xlu0 %459
        %461 = vrot.lane.b32.xlu0 %v363, 8
        %v462 = vpop.permute.xlu0 %461
        %vm489 = vcmask 1046528
        %v490 = vrot.slane %v335, 1
        %v491 = vrot.slane %v336, 1
        %v492 = vsel %vm489, %v490, %v491
        %v493 = vrot.slane %v337, 1
        %v494 = vsel %vm489, %v491, %v493
        %v495 = vrot.slane %v338, 1
        %v496 = vrot.slane %v339, 1
        %v497 = vsel %vm489, %v495, %v496
        %v498 = vrot.slane %v340, 1
        %v499 = vsel %vm489, %v496, %v498
        %v500 = vrot.slane %v341, 1
        %v501 = vrot.slane %v342, 1
        %v502 = vsel %vm489, %v500, %v501
        %v503 = vrot.slane %v343, 1
        %v504 = vsel %vm489, %v501, %v503
        %v505 = vrot.slane %v344, 1
        %v506 = vrot.slane %v345, 1
        %v507 = vsel %vm489, %v505, %v506
        %v508 = vrot.slane %v346, 1
        %v509 = vsel %vm489, %v506, %v508
        %v510 = vrot.slane %v347, 1
        %v511 = vrot.slane %v348, 1
        %v512 = vsel %vm489, %v510, %v511
        %v513 = vrot.slane %v349, 1
        %v514 = vsel %vm489, %v511, %v513
        %v515 = vrot.slane %v350, 1
        %v516 = vrot.slane %v351, 1
        %v517 = vsel %vm489, %v515, %v516
        %v518 = vrot.slane %v352, 1
        %v519 = vsel %vm489, %v516, %v518
        %v520 = vrot.slane %v353, 1
        %v521 = vrot.slane %v354, 1
        %v522 = vsel %vm489, %v520, %v521
        %v523 = vrot.slane %v355, 1
        %v524 = vsel %vm489, %v521, %v523
        %v525 = vrot.slane %v356, 1
        %v526 = vrot.slane %v357, 1
        %v527 = vsel %vm489, %v525, %v526
        %v528 = vrot.slane %v358, 1
        %v529 = vsel %vm489, %v526, %v528
        %530 = vrot.lane.b32.xlu0 %v492, 12
        %v531 = vpop.permute.xlu0 %530
        %532 = vrot.lane.b32.xlu0 %v494, 12
        %v533 = vpop.permute.xlu0 %532
        %534 = vrot.lane.b32.xlu0 %v497, 12
        %v535 = vpop.permute.xlu0 %534
        %536 = vrot.lane.b32.xlu0 %v499, 12
        %v537 = vpop.permute.xlu0 %536
        %538 = vrot.lane.b32.xlu0 %v502, 12
        %v539 = vpop.permute.xlu0 %538
        %540 = vrot.lane.b32.xlu0 %v504, 12
        %v541 = vpop.permute.xlu0 %540
        %542 = vrot.lane.b32.xlu0 %v507, 12
        %v543 = vpop.permute.xlu0 %542
        %544 = vrot.lane.b32.xlu0 %v509, 12
        %v545 = vpop.permute.xlu0 %544
        %546 = vrot.lane.b32.xlu0 %v512, 12
        %v547 = vpop.permute.xlu0 %546
        %548 = vrot.lane.b32.xlu0 %v514, 12
        %v549 = vpop.permute.xlu0 %548
        %550 = vrot.lane.b32.xlu0 %v517, 12
        %v551 = vpop.permute.xlu0 %550
        %552 = vrot.lane.b32.xlu0 %v519, 12
        %v553 = vpop.permute.xlu0 %552
        %554 = vrot.lane.b32.xlu0 %v522, 12
        %v555 = vpop.permute.xlu0 %554
        %556 = vrot.lane.b32.xlu0 %v524, 12
        %v557 = vpop.permute.xlu0 %556
        %558 = vrot.lane.b32.xlu0 %v527, 12
        %v559 = vpop.permute.xlu0 %558
        %560 = vrot.lane.b32.xlu0 %v529, 12
        %v561 = vpop.permute.xlu0 %560
        %v579 = vrot.slane %v359, 1
        %v580 = vrot.slane %v360, 1
        %v581 = vsel %vm489, %v579, %v580
        %v582 = vrot.slane %v361, 1
        %v583 = vsel %vm489, %v580, %v582
        %584 = vrot.lane.b32.xlu0 %v497, 16
        %v585 = vpop.permute.xlu0 %584
        %586 = vrot.lane.b32.xlu0 %v499, 16
        %v587 = vpop.permute.xlu0 %586
        %588 = vrot.lane.b32.xlu0 %v502, 16
        %v589 = vpop.permute.xlu0 %588
        %590 = vrot.lane.b32.xlu0 %v504, 16
        %v591 = vpop.permute.xlu0 %590
        %592 = vrot.lane.b32.xlu0 %v507, 16
        %v593 = vpop.permute.xlu0 %592
        %594 = vrot.lane.b32.xlu0 %v509, 16
        %v595 = vpop.permute.xlu0 %594
        %596 = vrot.lane.b32.xlu0 %v512, 16
        %v597 = vpop.permute.xlu0 %596
        %598 = vrot.lane.b32.xlu0 %v514, 16
        %v599 = vpop.permute.xlu0 %598
        %600 = vrot.lane.b32.xlu0 %v517, 16
        %v601 = vpop.permute.xlu0 %600
        %602 = vrot.lane.b32.xlu0 %v519, 16
        %v603 = vpop.permute.xlu0 %602
        %604 = vrot.lane.b32.xlu0 %v522, 16
        %v605 = vpop.permute.xlu0 %604
        %606 = vrot.lane.b32.xlu0 %v524, 16
        %v607 = vpop.permute.xlu0 %606
        %608 = vrot.lane.b32.xlu0 %v527, 16
        %v609 = vpop.permute.xlu0 %608
        %610 = vrot.lane.b32.xlu0 %v529, 16
        %v611 = vpop.permute.xlu0 %610
        %612 = vrot.lane.b32.xlu0 %v581, 16
        %v613 = vpop.permute.xlu0 %612
        %614 = vrot.lane.b32.xlu0 %v583, 16
        %v615 = vpop.permute.xlu0 %614
        %v633 = vrot.slane %v362, 1
        %v634 = vrot.slane %v363, 1
        %v635 = vsel %vm489, %v633, %v634
        %v636 = vrot.slane %v364, 1
        %v637 = vsel %vm489, %v634, %v636
        %638 = vrot.lane.b32.xlu0 %v502, 20
        %v639 = vpop.permute.xlu0 %638
        %640 = vrot.lane.b32.xlu0 %v504, 20
        %v641 = vpop.permute.xlu0 %640
        %642 = vrot.lane.b32.xlu0 %v507, 20
        %v643 = vpop.permute.xlu0 %642
        %644 = vrot.lane.b32.xlu0 %v509, 20
        %v645 = vpop.permute.xlu0 %644
        %646 = vrot.lane.b32.xlu0 %v512, 20
        %v647 = vpop.permute.xlu0 %646
        %648 = vrot.lane.b32.xlu0 %v514, 20
        %v649 = vpop.permute.xlu0 %648
        %650 = vrot.lane.b32.xlu0 %v517, 20
        %v651 = vpop.permute.xlu0 %650
        %652 = vrot.lane.b32.xlu0 %v519, 20
        %v653 = vpop.permute.xlu0 %652
        %654 = vrot.lane.b32.xlu0 %v522, 20
        %v655 = vpop.permute.xlu0 %654
        %656 = vrot.lane.b32.xlu0 %v524, 20
        %v657 = vpop.permute.xlu0 %656
        %658 = vrot.lane.b32.xlu0 %v527, 20
        %v659 = vpop.permute.xlu0 %658
        %660 = vrot.lane.b32.xlu0 %v529, 20
        %v661 = vpop.permute.xlu0 %660
        %662 = vrot.lane.b32.xlu0 %v581, 20
        %v663 = vpop.permute.xlu0 %662
        %664 = vrot.lane.b32.xlu0 %v583, 20
        %v665 = vpop.permute.xlu0 %664
        %666 = vrot.lane.b32.xlu0 %v635, 20
        %v667 = vpop.permute.xlu0 %666
        %668 = vrot.lane.b32.xlu0 %v637, 20
        %v669 = vpop.permute.xlu0 %668
        %vm686 = vcmask 1045504
        %v687 = vrot.slane %v335, 2
        %v688 = vrot.slane %v336, 2
        %v689 = vsel %vm686, %v687, %v688
        %v690 = vrot.slane %v337, 2
        %v691 = vsel %vm686, %v688, %v690
        %v692 = vrot.slane %v338, 2
        %v693 = vrot.slane %v339, 2
        %v694 = vsel %vm686, %v692, %v693
        %v695 = vrot.slane %v340, 2
        %v696 = vsel %vm686, %v693, %v695
        %v697 = vrot.slane %v341, 2
        %v698 = vrot.slane %v342, 2
        %v699 = vsel %vm686, %v697, %v698
        %v700 = vrot.slane %v343, 2
        %v701 = vsel %vm686, %v698, %v700
        %v702 = vrot.slane %v344, 2
        %v703 = vrot.slane %v345, 2
        %v704 = vsel %vm686, %v702, %v703
        %v705 = vrot.slane %v346, 2
        %v706 = vsel %vm686, %v703, %v705
        %v707 = vrot.slane %v347, 2
        %v708 = vrot.slane %v348, 2
        %v709 = vsel %vm686, %v707, %v708
        %v710 = vrot.slane %v349, 2
        %v711 = vsel %vm686, %v708, %v710
        %v712 = vrot.slane %v350, 2
        %v713 = vrot.slane %v351, 2
        %v714 = vsel %vm686, %v712, %v713
        %v715 = vrot.slane %v352, 2
        %v716 = vsel %vm686, %v713, %v715
        %v717 = vrot.slane %v353, 2
        %v718 = vrot.slane %v354, 2
        %v719 = vsel %vm686, %v717, %v718
        %v720 = vrot.slane %v355, 2
        %v721 = vsel %vm686, %v718, %v720
        %v722 = vrot.slane %v356, 2
        %v723 = vrot.slane %v357, 2
        %v724 = vsel %vm686, %v722, %v723
        %v725 = vrot.slane %v358, 2
        %v726 = vsel %vm686, %v723, %v725
        %727 = vrot.lane.b32.xlu0 %v689, 24
        %v728 = vpop.permute.xlu0 %727
        %729 = vrot.lane.b32.xlu0 %v691, 24
        %v730 = vpop.permute.xlu0 %729
        %731 = vrot.lane.b32.xlu0 %v694, 24
        %v732 = vpop.permute.xlu0 %731
        %733 = vrot.lane.b32.xlu0 %v696, 24
        %v734 = vpop.permute.xlu0 %733
        %735 = vrot.lane.b32.xlu0 %v699, 24
        %v736 = vpop.permute.xlu0 %735
        %737 = vrot.lane.b32.xlu0 %v701, 24
        %v738 = vpop.permute.xlu0 %737
        %739 = vrot.lane.b32.xlu0 %v704, 24
        %v740 = vpop.permute.xlu0 %739
        %741 = vrot.lane.b32.xlu0 %v706, 24
        %v742 = vpop.permute.xlu0 %741
        %743 = vrot.lane.b32.xlu0 %v709, 24
        %v744 = vpop.permute.xlu0 %743
        %745 = vrot.lane.b32.xlu0 %v711, 24
        %v746 = vpop.permute.xlu0 %745
        %747 = vrot.lane.b32.xlu0 %v714, 24
        %v748 = vpop.permute.xlu0 %747
        %749 = vrot.lane.b32.xlu0 %v716, 24
        %v750 = vpop.permute.xlu0 %749
        %751 = vrot.lane.b32.xlu0 %v719, 24
        %v752 = vpop.permute.xlu0 %751
        %753 = vrot.lane.b32.xlu0 %v721, 24
        %v754 = vpop.permute.xlu0 %753
        %755 = vrot.lane.b32.xlu0 %v724, 24
        %v756 = vpop.permute.xlu0 %755
        %757 = vrot.lane.b32.xlu0 %v726, 24
        %v758 = vpop.permute.xlu0 %757
        %v775 = vrot.slane %v359, 2
        %v776 = vrot.slane %v360, 2
        %v777 = vsel %vm686, %v775, %v776
        %v778 = vrot.slane %v361, 2
        %v779 = vsel %vm686, %v776, %v778
        %780 = vrot.lane.b32.xlu0 %v694, 28
        %v781 = vpop.permute.xlu0 %780
        %782 = vrot.lane.b32.xlu0 %v696, 28
        %v783 = vpop.permute.xlu0 %782
        %784 = vrot.lane.b32.xlu0 %v699, 28
        %v785 = vpop.permute.xlu0 %784
        %786 = vrot.lane.b32.xlu0 %v701, 28
        %v787 = vpop.permute.xlu0 %786
        %788 = vrot.lane.b32.xlu0 %v704, 28
        %v789 = vpop.permute.xlu0 %788
        %790 = vrot.lane.b32.xlu0 %v706, 28
        %v791 = vpop.permute.xlu0 %790
        %792 = vrot.lane.b32.xlu0 %v709, 28
        %v793 = vpop.permute.xlu0 %792
        %794 = vrot.lane.b32.xlu0 %v711, 28
        %v795 = vpop.permute.xlu0 %794
        %796 = vrot.lane.b32.xlu0 %v714, 28
        %v797 = vpop.permute.xlu0 %796
        %798 = vrot.lane.b32.xlu0 %v716, 28
        %v799 = vpop.permute.xlu0 %798
        %800 = vrot.lane.b32.xlu0 %v719, 28
        %v801 = vpop.permute.xlu0 %800
        %802 = vrot.lane.b32.xlu0 %v721, 28
        %v803 = vpop.permute.xlu0 %802
        %804 = vrot.lane.b32.xlu0 %v724, 28
        %v805 = vpop.permute.xlu0 %804
        %806 = vrot.lane.b32.xlu0 %v726, 28
        %v807 = vpop.permute.xlu0 %806
        %808 = vrot.lane.b32.xlu0 %v777, 28
        %v809 = vpop.permute.xlu0 %808
        %810 = vrot.lane.b32.xlu0 %v779, 28
        %v811 = vpop.permute.xlu0 %810
        %v828 = vrot.slane %v362, 2
        %v829 = vrot.slane %v363, 2
        %v830 = vsel %vm686, %v828, %v829
        %v831 = vrot.slane %v364, 2
        %v832 = vsel %vm686, %v829, %v831
        %833 = vrot.lane.b32.xlu0 %v699, 32
        %v834 = vpop.permute.xlu0 %833
        %835 = vrot.lane.b32.xlu0 %v701, 32
        %v836 = vpop.permute.xlu0 %835
        %837 = vrot.lane.b32.xlu0 %v704, 32
        %v838 = vpop.permute.xlu0 %837
        %839 = vrot.lane.b32.xlu0 %v706, 32
        %v840 = vpop.permute.xlu0 %839
        %841 = vrot.lane.b32.xlu0 %v709, 32
        %v842 = vpop.permute.xlu0 %841
        %843 = vrot.lane.b32.xlu0 %v711, 32
        %v844 = vpop.permute.xlu0 %843
        %845 = vrot.lane.b32.xlu0 %v714, 32
        %v846 = vpop.permute.xlu0 %845
        %847 = vrot.lane.b32.xlu0 %v716, 32
        %v848 = vpop.permute.xlu0 %847
        %849 = vrot.lane.b32.xlu0 %v719, 32
        %v850 = vpop.permute.xlu0 %849
        %851 = vrot.lane.b32.xlu0 %v721, 32
        %v852 = vpop.permute.xlu0 %851
        %853 = vrot.lane.b32.xlu0 %v724, 32
        %v854 = vpop.permute.xlu0 %853
        %855 = vrot.lane.b32.xlu0 %v726, 32
        %v856 = vpop.permute.xlu0 %855
        %857 = vrot.lane.b32.xlu0 %v777, 32
        %v858 = vpop.permute.xlu0 %857
        %859 = vrot.lane.b32.xlu0 %v779, 32
        %v860 = vpop.permute.xlu0 %859
        %861 = vrot.lane.b32.xlu0 %v830, 32
        %v862 = vpop.permute.xlu0 %861
        %863 = vrot.lane.b32.xlu0 %v832, 32
        %v864 = vpop.permute.xlu0 %863
        %vm881 = vcmask 31744
        %v882 = vsel %vm881, %v335, %v382
        %v883 = vsel %vm881, %v336, %v384
        %v884 = vsel %vm881, %v338, %v386
        %v885 = vsel %vm881, %v339, %v388
        %v886 = vsel %vm881, %v341, %v390
        %v887 = vsel %vm881, %v342, %v392
        %v888 = vsel %vm881, %v344, %v394
        %v889 = vsel %vm881, %v345, %v396
        %v890 = vsel %vm881, %v347, %v398
        %v891 = vsel %vm881, %v348, %v400
        %v892 = vsel %vm881, %v350, %v402
        %v893 = vsel %vm881, %v351, %v404
        %v894 = vsel %vm881, %v353, %v406
        %v895 = vsel %vm881, %v354, %v408
        %v896 = vsel %vm881, %v356, %v410
        %v897 = vsel %vm881, %v357, %v412
        %vm898 = vcmask 64512
        %v899 = vsel %vm898, %v882, %v432
        %v900 = vsel %vm898, %v883, %v434
        %v901 = vsel %vm898, %v884, %v436
        %v902 = vsel %vm898, %v885, %v438
        %v903 = vsel %vm898, %v886, %v440
        %v904 = vsel %vm898, %v887, %v442
        %v905 = vsel %vm898, %v888, %v444
        %v906 = vsel %vm898, %v889, %v446
        %v907 = vsel %vm898, %v890, %v448
        %v908 = vsel %vm898, %v891, %v450
        %v909 = vsel %vm898, %v892, %v452
        %v910 = vsel %vm898, %v893, %v454
        %v911 = vsel %vm898, %v894, %v456
        %v912 = vsel %vm898, %v895, %v458
        %v913 = vsel %vm898, %v896, %v460
        %v914 = vsel %vm898, %v897, %v462
        %vm915 = vcmask 97280
        %v916 = vsel %vm915, %v899, %v531
        %v917 = vsel %vm915, %v900, %v533
        %v918 = vsel %vm915, %v901, %v535
        %v919 = vsel %vm915, %v902, %v537
        %v920 = vsel %vm915, %v903, %v539
        %v921 = vsel %vm915, %v904, %v541
        %v922 = vsel %vm915, %v905, %v543
        %v923 = vsel %vm915, %v906, %v545
        %v924 = vsel %vm915, %v907, %v547
        %v925 = vsel %vm915, %v908, %v549
        %v926 = vsel %vm915, %v909, %v551
        %v927 = vsel %vm915, %v910, %v553
        %v928 = vsel %vm915, %v911, %v555
        %v929 = vsel %vm915, %v912, %v557
        %v930 = vsel %vm915, %v913, %v559
        %v931 = vsel %vm915, %v914, %v561
        %vm932 = vcmask 130048
        %v933 = vsel %vm932, %v916, %v585
        %v934 = vsel %vm932, %v917, %v587
        %v935 = vsel %vm932, %v918, %v589
        %v936 = vsel %vm932, %v919, %v591
        %v937 = vsel %vm932, %v920, %v593
        %v938 = vsel %vm932, %v921, %v595
        %v939 = vsel %vm932, %v922, %v597
        %v940 = vsel %vm932, %v923, %v599
        %v941 = vsel %vm932, %v924, %v601
        %v942 = vsel %vm932, %v925, %v603
        %v943 = vsel %vm932, %v926, %v605
        %v944 = vsel %vm932, %v927, %v607
        %v945 = vsel %vm932, %v928, %v609
        %v946 = vsel %vm932, %v929, %v611
        %v947 = vsel %vm932, %v930, %v613
        %v948 = vsel %vm932, %v931, %v615
        %vm949 = vcmask 162816
        %v950 = vsel %vm949, %v933, %v639
        %v951 = vsel %vm949, %v934, %v641
        %v952 = vsel %vm949, %v935, %v643
        %v953 = vsel %vm949, %v936, %v645
        %v954 = vsel %vm949, %v937, %v647
        %v955 = vsel %vm949, %v938, %v649
        %v956 = vsel %vm949, %v939, %v651
        %v957 = vsel %vm949, %v940, %v653
        %v958 = vsel %vm949, %v941, %v655
        %v959 = vsel %vm949, %v942, %v657
        %v960 = vsel %vm949, %v943, %v659
        %v961 = vsel %vm949, %v944, %v661
        %v962 = vsel %vm949, %v945, %v663
        %v963 = vsel %vm949, %v946, %v665
        %v964 = vsel %vm949, %v947, %v667
        %v965 = vsel %vm949, %v948, %v669
        %vm966 = vcmask 195584
        %v967 = vsel %vm966, %v950, %v728
        %v968 = vsel %vm966, %v951, %v730
        %v969 = vsel %vm966, %v952, %v732
        %v970 = vsel %vm966, %v953, %v734
        %v971 = vsel %vm966, %v954, %v736
        %v972 = vsel %vm966, %v955, %v738
        %v973 = vsel %vm966, %v956, %v740
        %v974 = vsel %vm966, %v957, %v742
        %v975 = vsel %vm966, %v958, %v744
        %v976 = vsel %vm966, %v959, %v746
        %v977 = vsel %vm966, %v960, %v748
        %v978 = vsel %vm966, %v961, %v750
        %v979 = vsel %vm966, %v962, %v752
        %v980 = vsel %vm966, %v963, %v754
        %v981 = vsel %vm966, %v964, %v756
        %v982 = vsel %vm966, %v965, %v758
        %vm983 = vcmask 228352
        %v984 = vsel %vm983, %v967, %v781
        %v985 = vsel %vm983, %v968, %v783
        %v986 = vsel %vm983, %v969, %v785
        %v987 = vsel %vm983, %v970, %v787
        %v988 = vsel %vm983, %v971, %v789
        %v989 = vsel %vm983, %v972, %v791
        %v990 = vsel %vm983, %v973, %v793
        %v991 = vsel %vm983, %v974, %v795
        %v992 = vsel %vm983, %v975, %v797
        %v993 = vsel %vm983, %v976, %v799
        %v994 = vsel %vm983, %v977, %v801
        %v995 = vsel %vm983, %v978, %v803
        %v996 = vsel %vm983, %v979, %v805
        %v997 = vsel %vm983, %v980, %v807
        %v998 = vsel %vm983, %v981, %v809
        %v999 = vsel %vm983, %v982, %v811
        %vm1000 = vcmask 261120
        %v1001 = vsel %vm1000, %v984, %v834
        %v1002 = vsel %vm1000, %v985, %v836
        %v1003 = vsel %vm1000, %v986, %v838
        %v1004 = vsel %vm1000, %v987, %v840
        %v1005 = vsel %vm1000, %v988, %v842
        %v1006 = vsel %vm1000, %v989, %v844
        %v1007 = vsel %vm1000, %v990, %v846
        %v1008 = vsel %vm1000, %v991, %v848
        %v1009 = vsel %vm1000, %v992, %v850
        %v1010 = vsel %vm1000, %v993, %v852
        %v1011 = vsel %vm1000, %v994, %v854
        %v1012 = vsel %vm1000, %v995, %v856
        %v1013 = vsel %vm1000, %v996, %v858
        %v1014 = vsel %vm1000, %v997, %v860
        %v1015 = vsel %vm1000, %v998, %v862
        %v1016 = vsel %vm1000, %v999, %v864
        %v1017 = vld [vmem:[%s2] sm:$0xff]
        %v1018 = vld [vmem:[%s2 + $0x8] sm:$0xff]
        %v1019 = vld [vmem:[%s2 + $0x10] sm:$0xff]
        %v1020 = vld [vmem:[%s2 + $0x18] sm:$0xff]
        %v1021 = vld [vmem:[%s2 + $0x20] sm:$0xf]
        %vm1022 = vcmask 293888
        %v1024 = vsel %vm1022, %v1001, 0
        %v1027 = vsel %vm1022, %v1002, 0
        %v1030 = vsel %vm1022, %v1003, 0
        %v1033 = vsel %vm1022, %v1004, 0
        %v1036 = vsel %vm1022, %v1005, 0
        %v1039 = vsel %vm1022, %v1006, 0
        %v1042 = vsel %vm1022, %v1007, 0
        %v1045 = vsel %vm1022, %v1008, 0
        %v1048 = vsel %vm1022, %v1009, 0
        %v1051 = vsel %vm1022, %v1010, 0
        %v1054 = vsel %vm1022, %v1011, 0
        %v1057 = vsel %vm1022, %v1012, 0
        %v1060 = vsel %vm1022, %v1013, 0
        %v1063 = vsel %vm1022, %v1014, 0
        %v1066 = vsel %vm1022, %v1015, 0
        %v1069 = vsel %vm1022, %v1016, 0
        %vm1071 = vcmask 1043456
        %v1073 = vsel %vm1071, %v1021, 0
        %1075 = vmatprep.subr.mxu0 0.0
        %1076 = vmatpush1.msra.mxu0 %v1017
        %1077 = vmatprep.subr.mxu0 0.0
        %1078 = vmatpush1.msra.mxu0 %v1018
        %1079 = vmatprep.subr.mxu0 0.0
        %1080 = vmatpush1.msra.mxu0 %v1019
        %1081 = vmatprep.subr.mxu0 0.0
        %1082 = vmatpush1.msra.mxu0 %v1020
        %1083 = vmatprep.subr.mxu0 0.0
        %1084 = vmatpush1.msra.mxu0 %v1073
        %1085 = vmatprep.subr.mxu0 0.0
        %1086 = vmatpush1.msra.mxu0 0.0
        %1087 = vmatprep.subr.mxu0 0.0
        %1088 = vmatpush1.msra.mxu0 0.0
        %1089 = vmatprep.subr.mxu0 0.0
        %1090 = vmatpush1.msra.mxu0 0.0
        %1091 = vmatprep.subr.mxu0 0.0
        %1092 = vmatpush1.msra.mxu0 0.0
        %1093 = vmatprep.subr.mxu0 0.0
        %1094 = vmatpush1.msra.mxu0 0.0
        %1095 = vmatprep.subr.mxu0 0.0
        %1096 = vmatpush1.msra.mxu0 0.0
        %1097 = vmatprep.subr.mxu0 0.0
        %1098 = vmatpush1.msra.mxu0 0.0
        %1099 = vmatprep.subr.mxu0 0.0
        %1100 = vmatpush1.msra.mxu0 0.0
        %1101 = vmatprep.subr.mxu0 0.0
        %1102 = vmatpush1.msra.mxu0 0.0
        %1103 = vmatprep.subr.mxu0 0.0
        %1104 = vmatpush1.msra.mxu0 0.0
        %1105 = vmatprep.subr.mxu0 0.0
        %1106 = vmatpush1.msra.mxu0 0.0
        %1107 = vmatprep.subr.mxu0 0.0
        %1108 = vmatpush1.msra.mxu0 0.0
        %1109 = vmatprep.subr.mxu0 0.0
        %1110 = vmatpush1.msra.mxu0 0.0
        %1111 = vmatprep.subr.mxu0 0.0
        %1112 = vmatpush1.msra.mxu0 0.0
        %1113 = vmatprep.subr.mxu0 0.0
        %1114 = vmatpush1.msra.mxu0 0.0
        %1115 = vmatprep.subr.mxu0 0.0
        %1116 = vmatpush1.msra.mxu0 0.0
        %1117 = vmatprep.subr.mxu0 0.0
        %1118 = vmatpush1.msra.mxu0 0.0
        %1119 = vmatprep.subr.mxu0 0.0
        %1120 = vmatpush1.msra.mxu0 0.0
        %1121 = vmatprep.subr.mxu0 0.0
        %1122 = vmatpush1.msra.mxu0 0.0
        %1123 = vmatprep.subr.mxu0 0.0
        %1124 = vmatpush1.msra.mxu0 0.0
        %1125 = vmatprep.subr.mxu0 0.0
        %1126 = vmatpush1.msra.mxu0 0.0
        %1127 = vmatprep.subr.mxu0 0.0
        %1128 = vmatpush1.msra.mxu0 0.0
        %1129 = vmatprep.subr.mxu0 0.0
        %1130 = vmatpush1.msra.mxu0 0.0
        %1131 = vmatprep.subr.mxu0 0.0
        %1132 = vmatpush1.msra.mxu0 0.0
        %1133 = vmatprep.subr.mxu0 0.0
        %1134 = vmatpush1.msra.mxu0 0.0
        %1135 = vmatprep.subr.mxu0 0.0
        %1136 = vmatpush1.msra.mxu0 0.0
        %1137 = vmatprep.subr.mxu0 0.0
        %1138 = vmatpush1.msra.mxu0 0.0
        %1139 = vmatprep.mubr.f32.mxu0 0.0
        %1140 = vmatmul.mubr.f32.gmra.mrb[0].mxu0 %v1024
        %v1141 = vpop.f32.mrb[0].mxu0
        %v1142 = vadd.f32 0.0, %v1141
        %v1143 = vpop.f32.mrb[0].mxu0
        %1144 = vmatprep.mubr.f32.mxu0 0.0
        %1145 = vmatmul.mubr.f32.gmra.mrb[0].mxu0 %v1027
        %v1146 = vpop.f32.mrb[0].mxu0
        %v1147 = vadd.f32 0.0, %v1146
        %v1148 = vpop.f32.mrb[0].mxu0
        %1149 = vmatprep.mubr.f32.mxu0 0.0
        %1150 = vmatmul.mubr.f32.gmra.mrb[0].mxu0 %v1030
        %v1151 = vpop.f32.mrb[0].mxu0
        %v1152 = vadd.f32 0.0, %v1151
        %v1153 = vpop.f32.mrb[0].mxu0
        %1154 = vmatprep.mubr.f32.mxu0 0.0
        %1155 = vmatmul.mubr.f32.gmra.mrb[0].mxu0 %v1033
        %v1156 = vpop.f32.mrb[0].mxu0
        %v1157 = vadd.f32 0.0, %v1156
        %v1158 = vpop.f32.mrb[0].mxu0
        %1159 = vmatprep.mubr.f32.mxu0 0.0
        %1160 = vmatmul.mubr.f32.gmra.mrb[0].mxu0 %v1036
        %v1161 = vpop.f32.mrb[0].mxu0
        %v1162 = vadd.f32 0.0, %v1161
        %v1163 = vpop.f32.mrb[0].mxu0
        %1164 = vmatprep.mubr.f32.mxu0 0.0
        %1165 = vmatmul.mubr.f32.gmra.mrb[0].mxu0 %v1039
        %v1166 = vpop.f32.mrb[0].mxu0
        %v1167 = vadd.f32 0.0, %v1166
        %v1168 = vpop.f32.mrb[0].mxu0
        %1169 = vmatprep.mubr.f32.mxu0 0.0
        %1170 = vmatmul.mubr.f32.gmra.mrb[0].mxu0 %v1042
        %v1171 = vpop.f32.mrb[0].mxu0
        %v1172 = vadd.f32 0.0, %v1171
        %v1173 = vpop.f32.mrb[0].mxu0
        %1174 = vmatprep.mubr.f32.mxu0 0.0
        %1175 = vmatmul.mubr.f32.gmra.mrb[0].mxu0 %v1045
        %v1176 = vpop.f32.mrb[0].mxu0
        %v1177 = vadd.f32 0.0, %v1176
        %v1178 = vpop.f32.mrb[0].mxu0
        %1179 = vmatprep.mubr.f32.mxu0 0.0
        %1180 = vmatmul.mubr.f32.gmra.mrb[0].mxu0 %v1048
        %v1181 = vpop.f32.mrb[0].mxu0
        %v1182 = vadd.f32 0.0, %v1181
        %v1183 = vpop.f32.mrb[0].mxu0
        %1184 = vmatprep.mubr.f32.mxu0 0.0
        %1185 = vmatmul.mubr.f32.gmra.mrb[0].mxu0 %v1051
        %v1186 = vpop.f32.mrb[0].mxu0
        %v1187 = vadd.f32 0.0, %v1186
        %v1188 = vpop.f32.mrb[0].mxu0
        %1189 = vmatprep.mubr.f32.mxu0 0.0
        %1190 = vmatmul.mubr.f32.gmra.mrb[0].mxu0 %v1054
        %v1191 = vpop.f32.mrb[0].mxu0
        %v1192 = vadd.f32 0.0, %v1191
        %v1193 = vpop.f32.mrb[0].mxu0
        %1194 = vmatprep.mubr.f32.mxu0 0.0
        %1195 = vmatmul.mubr.f32.gmra.mrb[0].mxu0 %v1057
        %v1196 = vpop.f32.mrb[0].mxu0
        %v1197 = vadd.f32 0.0, %v1196
        %v1198 = vpop.f32.mrb[0].mxu0
        %1199 = vmatprep.mubr.f32.mxu0 0.0
        %1200 = vmatmul.mubr.f32.gmra.mrb[0].mxu0 %v1060
        %v1201 = vpop.f32.mrb[0].mxu0
        %v1202 = vadd.f32 0.0, %v1201
        %v1203 = vpop.f32.mrb[0].mxu0
        %1204 = vmatprep.mubr.f32.mxu0 0.0
        %1205 = vmatmul.mubr.f32.gmra.mrb[0].mxu0 %v1063
        %v1206 = vpop.f32.mrb[0].mxu0
        %v1207 = vadd.f32 0.0, %v1206
        %v1208 = vpop.f32.mrb[0].mxu0
        %1209 = vmatprep.mubr.f32.mxu0 0.0
        %1210 = vmatmul.mubr.f32.gmra.mrb[0].mxu0 %v1066
        %v1211 = vpop.f32.mrb[0].mxu0
        %v1212 = vadd.f32 0.0, %v1211
        %v1213 = vpop.f32.mrb[0].mxu0
        %1214 = vmatprep.mubr.f32.mxu0 0.0
        %1215 = vmatmul.mubr.f32.gmra.mrb[0].mxu0 %v1069
        %v1216 = vpop.f32.mrb[0].mxu0
        %v1217 = vadd.f32 0.0, %v1216
        %v1218 = vpop.f32.mrb[0].mxu0
        %1219 = vdwg.mxu0
        %v1220 = vld [vmem:[%s3] sm:$0x1]
        %v1222 = vlaneseq
        %v1223 = vshrl.u32 %v1222, 7
        %v1224 = vsub.s32 0, %v1223
        %v1225 = vrot.slane %v1220, %v1224
        %v1227 = vmul.f32 %v1142, %v1225
        %v1228 = vmul.f32 %v1147, %v1225
        %v1229 = vmul.f32 %v1152, %v1225
        %v1230 = vmul.f32 %v1157, %v1225
        %v1231 = vmul.f32 %v1162, %v1225
        %v1232 = vmul.f32 %v1167, %v1225
        %v1233 = vmul.f32 %v1172, %v1225
        %v1234 = vmul.f32 %v1177, %v1225
        %v1235 = vmul.f32 %v1182, %v1225
        %v1236 = vmul.f32 %v1187, %v1225
        %v1237 = vmul.f32 %v1192, %v1225
        %v1238 = vmul.f32 %v1197, %v1225
        %v1239 = vmul.f32 %v1202, %v1225
        %v1240 = vmul.f32 %v1207, %v1225
        %v1241 = vmul.f32 %v1212, %v1225
        %v1242 = vmul.f32 %v1217, %v1225
        %v1243 = vld [vmem:[%s4] sm:$0x1]
        %v1245 = vlaneseq
        %v1246 = vshrl.u32 %v1245, 7
        %v1247 = vsub.s32 0, %v1246
        %v1248 = vrot.slane %v1243, %v1247
        %v1250 = vadd.f32 %v1227, %v1248
        %v1251 = vadd.f32 %v1228, %v1248
        %v1252 = vadd.f32 %v1229, %v1248
        %v1253 = vadd.f32 %v1230, %v1248
        %v1254 = vadd.f32 %v1231, %v1248
        %v1255 = vadd.f32 %v1232, %v1248
        %v1256 = vadd.f32 %v1233, %v1248
        %v1257 = vadd.f32 %v1234, %v1248
        %v1258 = vadd.f32 %v1235, %v1248
        %v1259 = vadd.f32 %v1236, %v1248
        %v1260 = vadd.f32 %v1237, %v1248
        %v1261 = vadd.f32 %v1238, %v1248
        %v1262 = vadd.f32 %v1239, %v1248
        %v1263 = vadd.f32 %v1240, %v1248
        %v1264 = vadd.f32 %v1241, %v1248
        %v1265 = vadd.f32 %v1242, %v1248
        %v1266 = vsub.f32 0.0, %v1250
        %v1267 = vsub.f32 0.0, %v1251
        %v1268 = vsub.f32 0.0, %v1252
        %v1269 = vsub.f32 0.0, %v1253
        %v1270 = vsub.f32 0.0, %v1254
        %v1271 = vsub.f32 0.0, %v1255
        %v1272 = vsub.f32 0.0, %v1256
        %v1273 = vsub.f32 0.0, %v1257
        %v1274 = vsub.f32 0.0, %v1258
        %v1275 = vsub.f32 0.0, %v1259
        %v1276 = vsub.f32 0.0, %v1260
        %v1277 = vsub.f32 0.0, %v1261
        %v1278 = vsub.f32 0.0, %v1262
        %v1279 = vsub.f32 0.0, %v1263
        %v1280 = vsub.f32 0.0, %v1264
        %v1281 = vsub.f32 0.0, %v1265
        %v1282 = vmul.f32 %v1266, 1.442695
        %v1283 = vpow.pop %v1282
        %v1284 = vmul.f32 %v1267, 1.442695
        %v1285 = vpow.pop %v1284
        %v1286 = vmul.f32 %v1268, 1.442695
        %v1287 = vpow.pop %v1286
        %v1288 = vmul.f32 %v1269, 1.442695
        %v1289 = vpow.pop %v1288
        %v1290 = vmul.f32 %v1270, 1.442695
        %v1291 = vpow.pop %v1290
        %v1292 = vmul.f32 %v1271, 1.442695
        %v1293 = vpow.pop %v1292
        %v1294 = vmul.f32 %v1272, 1.442695
        %v1295 = vpow.pop %v1294
        %v1296 = vmul.f32 %v1273, 1.442695
        %v1297 = vpow.pop %v1296
        %v1298 = vmul.f32 %v1274, 1.442695
        %v1299 = vpow.pop %v1298
        %v1300 = vmul.f32 %v1275, 1.442695
        %v1301 = vpow.pop %v1300
        %v1302 = vmul.f32 %v1276, 1.442695
        %v1303 = vpow.pop %v1302
        %v1304 = vmul.f32 %v1277, 1.442695
        %v1305 = vpow.pop %v1304
        %v1306 = vmul.f32 %v1278, 1.442695
        %v1307 = vpow.pop %v1306
        %v1308 = vmul.f32 %v1279, 1.442695
        %v1309 = vpow.pop %v1308
        %v1310 = vmul.f32 %v1280, 1.442695
        %v1311 = vpow.pop %v1310
        %v1312 = vmul.f32 %v1281, 1.442695
        %v1313 = vpow.pop %v1312
        %v1314 = vadd.f32 %v1283, 1.0
        %v1315 = vadd.f32 %v1285, 1.0
        %v1316 = vadd.f32 %v1287, 1.0
        %v1317 = vadd.f32 %v1289, 1.0
        %v1318 = vadd.f32 %v1291, 1.0
        %v1319 = vadd.f32 %v1293, 1.0
        %v1320 = vadd.f32 %v1295, 1.0
        %v1321 = vadd.f32 %v1297, 1.0
        %v1322 = vadd.f32 %v1299, 1.0
        %v1323 = vadd.f32 %v1301, 1.0
        %v1324 = vadd.f32 %v1303, 1.0
        %v1325 = vadd.f32 %v1305, 1.0
        %v1326 = vadd.f32 %v1307, 1.0
        %v1327 = vadd.f32 %v1309, 1.0
        %v1328 = vadd.f32 %v1311, 1.0
        %v1329 = vadd.f32 %v1313, 1.0
        %v1330 = vrcp.pop %v1314
        %v1331 = vrcp.pop %v1315
        %v1332 = vrcp.pop %v1316
        %v1333 = vrcp.pop %v1317
        %v1334 = vrcp.pop %v1318
        %v1335 = vrcp.pop %v1319
        %v1336 = vrcp.pop %v1320
        %v1337 = vrcp.pop %v1321
        %v1338 = vrcp.pop %v1322
        %v1339 = vrcp.pop %v1323
        %v1340 = vrcp.pop %v1324
        %v1341 = vrcp.pop %v1325
        %v1342 = vrcp.pop %v1326
        %v1343 = vrcp.pop %v1327
        %v1344 = vrcp.pop %v1328
        %v1345 = vrcp.pop %v1329
        %v1346 = vmul.f32 %v1250, %v1330
        %v1347 = vmul.f32 %v1251, %v1331
        %v1348 = vmul.f32 %v1252, %v1332
        %v1349 = vmul.f32 %v1253, %v1333
        %v1350 = vmul.f32 %v1254, %v1334
        %v1351 = vmul.f32 %v1255, %v1335
        %v1352 = vmul.f32 %v1256, %v1336
        %v1353 = vmul.f32 %v1257, %v1337
        %v1354 = vmul.f32 %v1258, %v1338
        %v1355 = vmul.f32 %v1259, %v1339
        %v1356 = vmul.f32 %v1260, %v1340
        %v1357 = vmul.f32 %v1261, %v1341
        %v1358 = vmul.f32 %v1262, %v1342
        %v1359 = vmul.f32 %v1263, %v1343
        %v1360 = vmul.f32 %v1264, %v1344
        %v1361 = vmul.f32 %v1265, %v1345
        %1362 = vst [vmem:[%s297] sm:$0xff] %v1346
        %1363 = vst [vmem:[%s297 + $0x8] sm:$0xff] %v1347
        %1364 = vst [vmem:[%s297 + $0x10] sm:$0xff] %v1348
        %1365 = vst [vmem:[%s297 + $0x18] sm:$0xff] %v1349
        %1366 = vst [vmem:[%s297 + $0x20] sm:$0xff] %v1350
        %1367 = vst [vmem:[%s297 + $0x28] sm:$0xff] %v1351
        %1368 = vst [vmem:[%s297 + $0x30] sm:$0xff] %v1352
        %1369 = vst [vmem:[%s297 + $0x38] sm:$0xff] %v1353
        %1370 = vst [vmem:[%s297 + $0x40] sm:$0xff] %v1354
        %1371 = vst [vmem:[%s297 + $0x48] sm:$0xff] %v1355
        %1372 = vst [vmem:[%s297 + $0x50] sm:$0xff] %v1356
        %1373 = vst [vmem:[%s297 + $0x58] sm:$0xff] %v1357
        %1374 = vst [vmem:[%s297 + $0x60] sm:$0xff] %v1358
        %1375 = vst [vmem:[%s297 + $0x68] sm:$0xff] %v1359
        %1376 = vst [vmem:[%s297 + $0x70] sm:$0xff] %v1360
        %1377 = vst [vmem:[%s297 + $0x78] sm:$0xff] %v1361
        %s1378 = sand.u32 %s164, 1
        %s1379 = scalar_lea.sflag [#allocation3], %s1378
        %s1380 = sand.u32 %s164, 1
        %s1381 = smul.addr %s1380, 128
        %s1382 = scalar_lea.vmem [#allocation2], %s1381
        // Predicated region
        $region41: #{tpu_custom_call.1} parent=39 // pred_check
          %p1383 = pneg %p174
        $region42: #{tpu_custom_call.1} parent=39 // pred_check_branch
          %1385 = sbr.rel (%p1383) target = $region44
        $region43: #{tpu_custom_call.1} parent=39 // pred_region
          %s1386 = smul.u32 8, %s24
          %s1388 = ssub.s32 2048, 2048
          %1389 = vsyncadd %s1379, %s1388
          %s1390 = smul.addr %s1386, 2
          %s1391 = smul.addr %s23, 32
          %s1392 = sadd.s32 %s1390, %s1391
          %s1393 = smul.addr %s1392, 128
          %s1394 = scalar_lea.hbm %s5, %s1393
          %s1395 = sshll.u32 %s1382, 4
          %s1396 = int_to_ptr.vmem [resolvable:$true] %s1395
          %1401 = dma.vmem_to_hbm [thread:$0]  %s1396, 2048, %s1394, %s1379, 128, 128, 8
        $region44: #{tpu_custom_call.1} parent=39 // pred_fallthru
          _
      $region40: #{tpu_custom_call.1} parent=5 // pred_fallthru
        _
      %p1402 = scmp.le.s32.totalorder 2, %s14
      // Predicated region
      $region45: #{tpu_custom_call.1} parent=5 // pred_check
        %p1403 = pneg %p1402
      $region46: #{tpu_custom_call.1} parent=5 // pred_check_branch
        %1405 = sbr.rel (%p1403) target = $region48
      $region47: #{tpu_custom_call.1} parent=5 // pred_region
        %s1406 = ssub.s32 %s14, 2
        // Predicated region
        $region49: #{tpu_custom_call.1} parent=47 // pred_check
          %p1407 = pneg %p180
        $region50: #{tpu_custom_call.1} parent=47 // pred_check_branch
          %1409 = sbr.rel (%p1407) target = $region52
        $region51: #{tpu_custom_call.1} parent=47 // pred_region
          %s1410 = sand.u32 %s165, 1
          %s1411 = scalar_lea.sflag [#allocation3], %s1410
          %s1412 = sand.u32 %s165, 1
          %s1413 = smul.addr %s1412, 128
          %s1414 = scalar_lea.vmem [#allocation2], %s1413
          %1415 = dma.done %s1411, 2048
        $region52: #{tpu_custom_call.1} parent=47 // pred_fallthru
          _
      $region48: #{tpu_custom_call.1} parent=5 // pred_fallthru
        _
    $region6: #{tpu_custom_call.1} parent=1 // loop_footer
      %s18 = sadd.s32 1, %s14
    $region7: #{tpu_custom_call.1} parent=1 // loop_footer_branch
      %13 = sbr.rel target = $region3
    $region8: #{tpu_custom_call.1} parent=1 // loop_exit
      _
    %1416 = vsyncpa [#allocation3], 1
    %s1417 = scalar_lea.sflag [#allocation3], 1
    %1418 = vsyncpa %s1417, 1

</llo_original>
